<compile_context>
chip_gen: v6e
topology: v6e:2x2x1
jax: 0.10.0
libtpu: 0.0.40
codegen_flags: <defaults>
</compile_context>

<pallas_src>
import functools

import numpy as np
import jax
import jax.numpy as jnp
from jax.experimental import pallas as pl
from jax.experimental.pallas import tpu as pltpu

try:  # prefer scipy's C implementation on host
    from scipy.optimize import linear_sum_assignment as _scipy_lsa
except Exception:  # pragma: no cover
    _scipy_lsa = None

_EPS = 1e-9
_NEG_INF = -1e9


def _round_up(x, m):
    return ((x + m - 1) // m) * m


def _cdiv(a, b):
    return -(-a // b)


def _cost_kernel(logits_ref, pbox_ref, onehot_ref, tbox_ref, c_ref, *,
                 w_class, w_bbox, w_giou, use_focal_loss, alpha, gamma):
    logits = logits_ref[...].astype(jnp.float32)   # [TILE_N, C_pad]
    pbox = pbox_ref[...].astype(jnp.float32)       # [TILE_N, 4]
    onehot = onehot_ref[...]                       # [C_pad, TILE_T]
    tbox = tbox_ref[...]                           # [4, TILE_T]

    # ---- classification cost: class gather as an MXU matmul prob @ onehot ----
    if use_focal_loss:
        prob = jax.nn.sigmoid(logits)
        p_t = jnp.dot(prob, onehot, preferred_element_type=jnp.float32)
        if gamma == 2.0:
            pow_p = p_t * p_t                       # VPU mul instead of EUP pow
            pow_1mp = (1.0 - p_t) * (1.0 - p_t)
        else:
            pow_p = p_t ** gamma
            pow_1mp = (1.0 - p_t) ** gamma
        neg = (1.0 - alpha) * pow_p * (-jnp.log(1.0 - p_t + 1e-8))
        pos = alpha * pow_1mp * (-jnp.log(p_t + 1e-8))
        cost_class = pos - neg
    else:
        # Padded class lanes were filled with -1e9 by the wrapper, so the
        # softmax denominator is exactly the un-padded one.
        m = jnp.max(logits, axis=-1, keepdims=True)
        e = jnp.exp(logits - m)
        prob = e / jnp.sum(e, axis=-1, keepdims=True)
        cost_class = -jnp.dot(prob, onehot, preferred_element_type=jnp.float32)

    # ---- narrow-width box quantities; widened lazily by implicit broadcast ----
    pcx, pcy = pbox[:, 0:1], pbox[:, 1:2]                     # [TILE_N, 1]
    pw, ph = pbox[:, 2:3], pbox[:, 3:4]
    px0, py0 = pcx - 0.5 * pw, pcy - 0.5 * ph
    px1, py1 = pcx + 0.5 * pw, pcy + 0.5 * ph
    area_p = (px1 - px0) * (py1 - py0)                        # [TILE_N, 1]

    tcx, tcy = tbox[0:1, :], tbox[1:2, :]                     # [1, TILE_T]
    tw, th = tbox[2:3, :], tbox[3:4, :]
    tx0, ty0 = tcx - 0.5 * tw, tcy - 0.5 * th
    tx1, ty1 = tcx + 0.5 * tw, tcy + 0.5 * th
    area_t = (tx1 - tx0) * (ty1 - ty0)                        # [1, TILE_T]

    # L1 cdist over the 4 box coordinates (only here does work go full-width).
    cost_bbox = (jnp.abs(pcx - tcx) + jnp.abs(pcy - tcy)
                 + jnp.abs(pw - tw) + jnp.abs(ph - th))

    # Pairwise GIoU on cxcywh -> xyxy boxes.
    inter_w = jnp.maximum(jnp.minimum(px1, tx1) - jnp.maximum(px0, tx0), 0.0)
    inter_h = jnp.maximum(jnp.minimum(py1, ty1) - jnp.maximum(py0, ty0), 0.0)
    inter = inter_w * inter_h
    union = (area_p + area_t) - inter
    iou = inter / (union + _EPS)
    enc_w = jnp.maximum(jnp.maximum(px1, tx1) - jnp.minimum(px0, tx0), 0.0)
    enc_h = jnp.maximum(jnp.maximum(py1, ty1) - jnp.minimum(py0, ty0), 0.0)
    area_c = enc_w * enc_h
    giou = iou - (area_c - union) / (area_c + _EPS)

    c_ref[...] = (w_bbox * cost_bbox + w_class * cost_class
                  - w_giou * giou).astype(c_ref.dtype)


def _choose_tiles(n, t, nc):
    nc_pad = _round_up(nc, 128)

    # Lane-dense T tiles; tile T when the target count is large.
    tile_t = min(_round_up(max(t, 1), 128), 512)
    t_pad = _round_up(max(t, 1), tile_t)

    # Adaptive N tiles: minimal padding, target <= 512 rows, and >= 2 tiles
    # so v7x's two TensorCores both get work (cheap on single-TC v5e/v6e).
    k = _cdiv(n, 512)
    if n > 8:
        k = max(k, 2)
    tile_n = _round_up(_cdiv(n, max(k, 1)), 8)

    # Bound VMEM footprint (double-buffered I/O + compiler-materialized
    # full-width intermediates) to ~24 MiB: safe against v7x's 64 MiB VMEM
    # and within the 48 MiB scoped limit we request below.
    budget = 24 * 1024 * 1024
    fixed = 2 * (nc_pad + 8) * tile_t * 4
    per_row = tile_t * 4 * 18 + nc_pad * 4 * 6 + 128 * 4 * 2
    max_tile_n = max(8, ((budget - fixed) // per_row) // 8 * 8)
    tile_n = max(8, min(tile_n, max_tile_n))
    n_pad = _round_up(n, tile_n)
    return tile_n, n_pad, tile_t, t_pad, nc_pad


@functools.partial(jax.jit, static_argnames=(
    "cost_class", "cost_bbox", "cost_giou", "use_focal_loss", "alpha", "gamma"))
def compute_cost_matrix(pred_logits, pred_boxes, tgt_ids, tgt_boxes, *,
                        cost_class, cost_bbox, cost_giou,
                        use_focal_loss=False, alpha=0.25, gamma=2.0):
    bs, nq, nc = pred_logits.shape
    n = bs * nq
    t = int(tgt_ids.shape[0])

    tile_n, n_pad, tile_t, t_pad, nc_pad = _choose_tiles(n, t, nc)

    # Inputs stay in their native dtype (cast happens in-kernel); reshape/pad
    # are fused by XLA inside this jit (no extra f32 HBM round trip).
    logits = pred_logits.reshape(n, nc)
    if nc_pad > nc:
        logits = jnp.pad(logits, ((0, 0), (0, nc_pad - nc)),
                         constant_values=_NEG_INF)
    if n_pad > n:
        logits = jnp.pad(logits, ((0, n_pad - n), (0, 0)))
    pbox = pred_boxes.reshape(n, 4)
    if n_pad > n:
        pbox = jnp.pad(pbox, ((0, n_pad - n), (0, 0)))

    # One-hot [C_pad, T_pad] built once; padded target columns use class id -1
    # so they stay all-zero.
    tids_pad = jnp.full((t_pad,), -1, jnp.int32).at[:t].set(
        tgt_ids.astype(jnp.int32))
    onehot = (jnp.arange(nc_pad, dtype=jnp.int32)[:, None]
              == tids_pad[None, :]).astype(jnp.float32)          # [C_pad, T_pad]

    tbox_t = jnp.zeros((4, t_pad), jnp.float32).at[:, :t].set(
        tgt_boxes.astype(jnp.float32).T)                          # [4, T_pad]

    kernel = functools.partial(
        _cost_kernel,
        w_class=float(cost_class), w_bbox=float(cost_bbox),
        w_giou=float(cost_giou), use_focal_loss=bool(use_focal_loss),
        alpha=float(alpha), gamma=float(gamma))

    c = pl.pallas_call(
        kernel,
        out_shape=jax.ShapeDtypeStruct((n_pad, t_pad), jnp.float32),
        grid=(n_pad // tile_n, t_pad // tile_t),
        in_specs=[
            pl.BlockSpec((tile_n, nc_pad), lambda i, j: (i, 0)),  # resident over j
            pl.BlockSpec((tile_n, 4), lambda i, j: (i, 0)),       # resident over j
            pl.BlockSpec((nc_pad, tile_t), lambda i, j: (0, j)),
            pl.BlockSpec((4, tile_t), lambda i, j: (0, j)),
        ],
        out_specs=pl.BlockSpec((tile_n, tile_t), lambda i, j: (i, j)),
        compiler_params=pltpu.CompilerParams(
            dimension_semantics=("parallel", "parallel"),
            vmem_limit_bytes=48 * 1024 * 1024),
    )(logits, pbox, onehot, tbox_t)

    return c[:n, :t].reshape(bs, nq, t)


def _linear_sum_assignment_py(cost):
    """Hungarian algorithm (potentials method), scipy-compatible output."""
    cost = np.asarray(cost, dtype=np.float64)
    transposed = False
    if cost.shape[0] > cost.shape[1]:
        cost = cost.T
        transposed = True
    n, m = cost.shape
    INF = 1e18
    u = np.zeros(n + 1)
    v = np.zeros(m + 1)
    p = np.zeros(m + 1, dtype=np.int64)
    way = np.zeros(m + 1, dtype=np.int64)
    for i in range(1, n + 1):
        p[0] = i
        j0 = 0
        minv = np.full(m + 1, INF)
        used = np.zeros(m + 1, dtype=bool)
        while True:
            used[j0] = True
            i0 = p[j0]
            delta = INF
            j1 = 0
            for j in range(1, m + 1):
                if not used[j]:
                    cur = cost[i0 - 1, j - 1] - u[i0] - v[j]
                    if cur < minv[j]:
                        minv[j] = cur
                        way[j] = j0
                    if minv[j] < delta:
                        delta = minv[j]
                        j1 = j
            for j in range(m + 1):
                if used[j]:
                    u[p[j]] += delta
                    v[j] -= delta
                else:
                    minv[j] -= delta
            j0 = j1
            if p[j0] == 0:
                break
        while True:
            j1 = way[j0]
            p[j0] = p[j1]
            j0 = j1
            if j0 == 0:
                break
    rows, cols = [], []
    for j in range(1, m + 1):
        if p[j] != 0:
            rows.append(p[j] - 1)
            cols.append(j - 1)
    rows = np.asarray(rows, dtype=np.int64)
    cols = np.asarray(cols, dtype=np.int64)
    if transposed:
        rows, cols = cols, rows
    order = np.argsort(rows)
    return rows[order], cols[order]


def _linear_sum_assignment(cost):
    if _scipy_lsa is not None:
        r, c = _scipy_lsa(np.asarray(cost, dtype=np.float64))
        return np.asarray(r, np.int64), np.asarray(c, np.int64)
    return _linear_sum_assignment_py(cost)


def hungarian_matcher(outputs, targets, weight_dict, use_focal_loss=False,
                      alpha=0.25, gamma=2.0):
    pred_logits = outputs['pred_logits']
    pred_boxes = outputs['pred_boxes']
    sizes = [int(v['boxes'].shape[0]) for v in targets]
    tgt_ids = jnp.concatenate([v['labels'] for v in targets])
    tgt_boxes = jnp.concatenate([v['boxes'] for v in targets], axis=0)

    c = compute_cost_matrix(
        pred_logits, pred_boxes, tgt_ids, tgt_boxes,
        cost_class=float(weight_dict['cost_class']),
        cost_bbox=float(weight_dict['cost_bbox']),
        cost_giou=float(weight_dict['cost_giou']),
        use_focal_loss=bool(use_focal_loss), alpha=float(alpha),
        gamma=float(gamma))
    c = jax.block_until_ready(c)
    c_np = np.asarray(c)

    # TODO(synk): linear_sum_assignment is a sequential combinatorial algorithm
    # with no clean Pallas equivalent; run it on host over the kernel-produced
    # (block-diagonal slices of the) cost matrix.
    indices = []
    offset = 0
    for i, s in enumerate(sizes):
        sub = c_np[i, :, offset:offset + s]
        row, col = _linear_sum_assignment(sub)
        indices.append((row, col))
        offset += s
    return indices, c


def _reference_cost(pred_logits, pred_boxes, tgt_ids, tgt_boxes,
                    wc, wb, wg, use_focal_loss=False, alpha=0.25, gamma=2.0):
    """Pure numpy reference of the cost matrix (both class-cost paths)."""
    logits = np.asarray(pred_logits, np.float32).reshape(-1, pred_logits.shape[-1])
    pbox = np.asarray(pred_boxes, np.float32).reshape(-1, 4)
    tids = np.asarray(tgt_ids, np.int64)
    tbox = np.asarray(tgt_boxes, np.float32)

    if use_focal_loss:
        prob = 1.0 / (1.0 + np.exp(-logits))
        p_t = prob[:, tids]
        neg = (1 - alpha) * (p_t ** gamma) * (-np.log(1 - p_t + 1e-8))
        pos = alpha * ((1 - p_t) ** gamma) * (-np.log(p_t + 1e-8))
        cost_class = pos - neg
    else:
        e = np.exp(logits - logits.max(-1, keepdims=True))
        prob = e / e.sum(-1, keepdims=True)
        cost_class = -prob[:, tids]
    cost_bbox = np.abs(pbox[:, None, :] - tbox[None, :, :]).sum(-1)

    def to_xyxy(b):
        cx, cy, w, h = b[:, 0], b[:, 1], b[:, 2], b[:, 3]
        return np.stack([cx - 0.5 * w, cy - 0.5 * h, cx + 0.5 * w, cy + 0.5 * h], -1)

    a = to_xyxy(pbox)
    b = to_xyxy(tbox)
    area_a = (a[:, 2] - a[:, 0]) * (a[:, 3] - a[:, 1])
    area_b = (b[:, 2] - b[:, 0]) * (b[:, 3] - b[:, 1])
    lt = np.maximum(a[:, None, :2], b[None, :, :2])
    rb = np.minimum(a[:, None, 2:], b[None, :, 2:])
    wh = np.clip(rb - lt, 0, None)
    inter = wh[..., 0] * wh[..., 1]
    union = area_a[:, None] + area_b[None, :] - inter
    iou = inter / union
    ltc = np.minimum(a[:, None, :2], b[None, :, :2])
    rbc = np.maximum(a[:, None, 2:], b[None, :, 2:])
    whc = np.clip(rbc - ltc, 0, None)
    areac = whc[..., 0] * whc[..., 1]
    giou = iou - (areac - union) / areac
    c = wb * cost_bbox + wc * cost_class + wg * (-giou)
    return c.reshape(pred_logits.shape[0], pred_logits.shape[1], -1)


if __name__ == "__main__":
    bs, num_queries, num_classes = 2, 8, 32
    weight_dict = {'cost_class': 2.0, 'cost_bbox': 5.0, 'cost_giou': 2.0}

    key = jax.random.PRNGKey(0)
    k1, k2, k3, k4, k5, k6 = jax.random.split(key, 6)

    pred_logits = jax.random.normal(k1, (bs, num_queries, num_classes), jnp.float32)
    cxy = jax.random.uniform(k2, (bs, num_queries, 2), minval=0.2, maxval=0.8)
    wh = jax.random.uniform(k3, (bs, num_queries, 2), minval=0.1, maxval=0.4)
    pred_boxes = jnp.concatenate([cxy, wh], axis=-1)

    sizes = [3, 2]
    targets = []
    lab_keys = jax.random.split(k4, len(sizes))
    box_keys = jax.random.split(k5, len(sizes))
    for s, lk, bk in zip(sizes, lab_keys, box_keys):
        labels = jax.random.randint(lk, (s,), 0, num_classes, dtype=jnp.int32)
        bk1, bk2 = jax.random.split(bk)
        tcxy = jax.random.uniform(bk1, (s, 2), minval=0.2, maxval=0.8)
        twh = jax.random.uniform(bk2, (s, 2), minval=0.1, maxval=0.4)
        targets.append({'labels': labels, 'boxes': jnp.concatenate([tcxy, twh], -1)})

    outputs = {'pred_logits': pred_logits, 'pred_boxes': pred_boxes}
    tgt_ids = jnp.concatenate([t['labels'] for t in targets])
    tgt_boxes = jnp.concatenate([t['boxes'] for t in targets], axis=0)

    # --- softmax class-cost path ---
    indices, c = hungarian_matcher(outputs, targets, weight_dict,
                                   use_focal_loss=False)
    jax.block_until_ready(c)
    c_ref = _reference_cost(pred_logits, pred_boxes, tgt_ids, tgt_boxes,
                            weight_dict['cost_class'], weight_dict['cost_bbox'],
                            weight_dict['cost_giou'], use_focal_loss=False)
    np.testing.assert_allclose(np.asarray(c), c_ref, rtol=1e-4, atol=1e-4)
    for (row, col), s in zip(indices, sizes):
        assert len(row) == len(col) == min(num_queries, s)

    # --- focal class-cost path ---
    indices_f, c_f = hungarian_matcher(outputs, targets, weight_dict,
                                       use_focal_loss=True, alpha=0.25, gamma=2.0)
    jax.block_until_ready(c_f)
    c_ref_f = _reference_cost(pred_logits, pred_boxes, tgt_ids, tgt_boxes,
                              weight_dict['cost_class'], weight_dict['cost_bbox'],
                              weight_dict['cost_giou'], use_focal_loss=True,
                              alpha=0.25, gamma=2.0)
    np.testing.assert_allclose(np.asarray(c_f), c_ref_f, rtol=1e-4, atol=1e-4)
    for (row, col), s in zip(indices_f, sizes):
        assert len(row) == len(col) == min(num_queries, s)

    print("KERNEL_OK")
</pallas_src>

<mosaic_0001>
module attributes {stable_mosaic.version = 11 : i64} {
  func.func @_cost_kernel(%arg0: i32, %arg1: i32, %arg2: memref<8x128xf32, #tpu.memory_space<vmem>>, %arg3: memref<8x4xf32, #tpu.memory_space<vmem>>, %arg4: memref<128x128xf32, #tpu.memory_space<vmem>>, %arg5: memref<4x128xf32, #tpu.memory_space<vmem>>, %arg6: memref<8x128xf32, #tpu.memory_space<vmem>>) attributes {dimension_semantics = [#tpu.dimension_semantics<parallel>, #tpu.dimension_semantics<parallel>], iteration_bounds = array<i64: 2, 1>, scalar_prefetch = 0 : i64, scratch_operands = 0 : i64, tpu.core_type = #tpu.core_type<tc>, window_params = [{transform_indices = @transform_0, window_bounds = array<i64: 8, 128>}, {transform_indices = @transform_1, window_bounds = array<i64: 8, 4>}, {transform_indices = @transform_2, window_bounds = array<i64: 128, 128>}, {transform_indices = @transform_3, window_bounds = array<i64: 4, 128>}, {transform_indices = @transform_4, window_bounds = array<i64: 8, 128>}]} {
    %c0 = arith.constant 0 : index
    %c0_0 = arith.constant 0 : index
    %0 = vector.load %arg2[%c0, %c0_0] : memref<8x128xf32, #tpu.memory_space<vmem>>, vector<8x128xf32>
    %c0_1 = arith.constant 0 : index
    %c0_2 = arith.constant 0 : index
    %1 = vector.load %arg3[%c0_1, %c0_2] : memref<8x4xf32, #tpu.memory_space<vmem>>, vector<8x4xf32>
    %c0_3 = arith.constant 0 : index
    %c0_4 = arith.constant 0 : index
    %2 = vector.load %arg4[%c0_3, %c0_4] : memref<128x128xf32, #tpu.memory_space<vmem>>, vector<128x128xf32>
    %c0_5 = arith.constant 0 : index
    %c0_6 = arith.constant 0 : index
    %3 = vector.load %arg5[%c0_5, %c0_6] : memref<4x128xf32, #tpu.memory_space<vmem>>, vector<4x128xf32>
    %cst = arith.constant dense<0xFF800000> : vector<8xf32>
    %4 = vector.multi_reduction <maximumf>, %0, %cst [1] : vector<8x128xf32> to vector<8xf32>
    %5 = vector.shape_cast %4 : vector<8xf32> to vector<8x1xf32>
    %6 = vector.broadcast %5 : vector<8x1xf32> to vector<8x128xf32>
    %7 = arith.subf %0, %6 : vector<8x128xf32>
    %8 = math.exp %7 : vector<8x128xf32>
    %cst_7 = arith.constant dense<0.000000e+00> : vector<8xf32>
    %9 = vector.multi_reduction <add>, %8, %cst_7 [1] : vector<8x128xf32> to vector<8xf32>
    %10 = vector.shape_cast %9 : vector<8xf32> to vector<8x1xf32>
    %11 = vector.broadcast %10 : vector<8x1xf32> to vector<8x128xf32>
    %12 = arith.divf %8, %11 : vector<8x128xf32>
    %cst_8 = arith.constant dense<0.000000e+00> : vector<8x128xf32>
    %13 = tpu.matmul %12, %2, %cst_8 {dimension_numbers = #tpu.dot_dimension_numbers<[1], [0], [0], [1], [0, 0, 1, 1], [], []>} : vector<8x128xf32>, vector<128x128xf32>, vector<8x128xf32> -> vector<8x128xf32>
    %cst_9 = arith.constant 0.000000e+00 : f32
    %14 = vector.broadcast %cst_9 : f32 to vector<8x128xf32>
    %15 = arith.subf %14, %13 : vector<8x128xf32>
    %16 = vector.extract_strided_slice %1 {offsets = [0, 0], sizes = [8, 1], strides = [1, 1]} : vector<8x4xf32> to vector<8x1xf32>
    %17 = vector.extract_strided_slice %1 {offsets = [0, 1], sizes = [8, 1], strides = [1, 1]} : vector<8x4xf32> to vector<8x1xf32>
    %18 = vector.extract_strided_slice %1 {offsets = [0, 2], sizes = [8, 1], strides = [1, 1]} : vector<8x4xf32> to vector<8x1xf32>
    %19 = vector.extract_strided_slice %1 {offsets = [0, 3], sizes = [8, 1], strides = [1, 1]} : vector<8x4xf32> to vector<8x1xf32>
    %cst_10 = arith.constant 5.000000e-01 : f32
    %20 = vector.broadcast %cst_10 : f32 to vector<8x1xf32>
    %21 = arith.mulf %20, %18 : vector<8x1xf32>
    %22 = arith.subf %16, %21 : vector<8x1xf32>
    %cst_11 = arith.constant 5.000000e-01 : f32
    %23 = vector.broadcast %cst_11 : f32 to vector<8x1xf32>
    %24 = arith.mulf %23, %19 : vector<8x1xf32>
    %25 = arith.subf %17, %24 : vector<8x1xf32>
    %cst_12 = arith.constant 5.000000e-01 : f32
    %26 = vector.broadcast %cst_12 : f32 to vector<8x1xf32>
    %27 = arith.mulf %26, %18 : vector<8x1xf32>
    %28 = arith.addf %16, %27 : vector<8x1xf32>
    %cst_13 = arith.constant 5.000000e-01 : f32
    %29 = vector.broadcast %cst_13 : f32 to vector<8x1xf32>
    %30 = arith.mulf %29, %19 : vector<8x1xf32>
    %31 = arith.addf %17, %30 : vector<8x1xf32>
    %32 = arith.subf %28, %22 : vector<8x1xf32>
    %33 = arith.subf %31, %25 : vector<8x1xf32>
    %34 = arith.mulf %32, %33 : vector<8x1xf32>
    %35 = vector.extract_strided_slice %3 {offsets = [0, 0], sizes = [1, 128], strides = [1, 1]} : vector<4x128xf32> to vector<1x128xf32>
    %36 = vector.extract_strided_slice %3 {offsets = [1, 0], sizes = [1, 128], strides = [1, 1]} : vector<4x128xf32> to vector<1x128xf32>
    %37 = vector.extract_strided_slice %3 {offsets = [2, 0], sizes = [1, 128], strides = [1, 1]} : vector<4x128xf32> to vector<1x128xf32>
    %38 = vector.extract_strided_slice %3 {offsets = [3, 0], sizes = [1, 128], strides = [1, 1]} : vector<4x128xf32> to vector<1x128xf32>
    %cst_14 = arith.constant 5.000000e-01 : f32
    %39 = vector.broadcast %cst_14 : f32 to vector<1x128xf32>
    %40 = arith.mulf %39, %37 : vector<1x128xf32>
    %41 = arith.subf %35, %40 : vector<1x128xf32>
    %cst_15 = arith.constant 5.000000e-01 : f32
    %42 = vector.broadcast %cst_15 : f32 to vector<1x128xf32>
    %43 = arith.mulf %42, %38 : vector<1x128xf32>
    %44 = arith.subf %36, %43 : vector<1x128xf32>
    %cst_16 = arith.constant 5.000000e-01 : f32
    %45 = vector.broadcast %cst_16 : f32 to vector<1x128xf32>
    %46 = arith.mulf %45, %37 : vector<1x128xf32>
    %47 = arith.addf %35, %46 : vector<1x128xf32>
    %cst_17 = arith.constant 5.000000e-01 : f32
    %48 = vector.broadcast %cst_17 : f32 to vector<1x128xf32>
    %49 = arith.mulf %48, %38 : vector<1x128xf32>
    %50 = arith.addf %36, %49 : vector<1x128xf32>
    %51 = arith.subf %47, %41 : vector<1x128xf32>
    %52 = arith.subf %50, %44 : vector<1x128xf32>
    %53 = arith.mulf %51, %52 : vector<1x128xf32>
    %54 = vector.broadcast %16 : vector<8x1xf32> to vector<8x128xf32>
    %55 = vector.broadcast %35 : vector<1x128xf32> to vector<8x128xf32>
    %56 = arith.subf %54, %55 : vector<8x128xf32>
    %57 = math.absf %56 : vector<8x128xf32>
    %58 = vector.broadcast %17 : vector<8x1xf32> to vector<8x128xf32>
    %59 = vector.broadcast %36 : vector<1x128xf32> to vector<8x128xf32>
    %60 = arith.subf %58, %59 : vector<8x128xf32>
    %61 = math.absf %60 : vector<8x128xf32>
    %62 = arith.addf %57, %61 : vector<8x128xf32>
    %63 = vector.broadcast %18 : vector<8x1xf32> to vector<8x128xf32>
    %64 = vector.broadcast %37 : vector<1x128xf32> to vector<8x128xf32>
    %65 = arith.subf %63, %64 : vector<8x128xf32>
    %66 = math.absf %65 : vector<8x128xf32>
    %67 = arith.addf %62, %66 : vector<8x128xf32>
    %68 = vector.broadcast %19 : vector<8x1xf32> to vector<8x128xf32>
    %69 = vector.broadcast %38 : vector<1x128xf32> to vector<8x128xf32>
    %70 = arith.subf %68, %69 : vector<8x128xf32>
    %71 = math.absf %70 : vector<8x128xf32>
    %72 = arith.addf %67, %71 : vector<8x128xf32>
    %73 = vector.broadcast %28 : vector<8x1xf32> to vector<8x128xf32>
    %74 = vector.broadcast %47 : vector<1x128xf32> to vector<8x128xf32>
    %75 = arith.minimumf %73, %74 : vector<8x128xf32>
    %76 = vector.broadcast %22 : vector<8x1xf32> to vector<8x128xf32>
    %77 = vector.broadcast %41 : vector<1x128xf32> to vector<8x128xf32>
    %78 = arith.maximumf %76, %77 : vector<8x128xf32>
    %79 = arith.subf %75, %78 : vector<8x128xf32>
    %cst_18 = arith.constant 0.000000e+00 : f32
    %80 = vector.broadcast %cst_18 : f32 to vector<8x128xf32>
    %81 = arith.maximumf %79, %80 : vector<8x128xf32>
    %82 = vector.broadcast %31 : vector<8x1xf32> to vector<8x128xf32>
    %83 = vector.broadcast %50 : vector<1x128xf32> to vector<8x128xf32>
    %84 = arith.minimumf %82, %83 : vector<8x128xf32>
    %85 = vector.broadcast %25 : vector<8x1xf32> to vector<8x128xf32>
    %86 = vector.broadcast %44 : vector<1x128xf32> to vector<8x128xf32>
    %87 = arith.maximumf %85, %86 : vector<8x128xf32>
    %88 = arith.subf %84, %87 : vector<8x128xf32>
    %cst_19 = arith.constant 0.000000e+00 : f32
    %89 = vector.broadcast %cst_19 : f32 to vector<8x128xf32>
    %90 = arith.maximumf %88, %89 : vector<8x128xf32>
    %91 = arith.mulf %81, %90 : vector<8x128xf32>
    %92 = vector.broadcast %34 : vector<8x1xf32> to vector<8x128xf32>
    %93 = vector.broadcast %53 : vector<1x128xf32> to vector<8x128xf32>
    %94 = arith.addf %92, %93 : vector<8x128xf32>
    %95 = arith.subf %94, %91 : vector<8x128xf32>
    %cst_20 = arith.constant 9.99999971E-10 : f32
    %96 = vector.broadcast %cst_20 : f32 to vector<8x128xf32>
    %97 = arith.addf %95, %96 : vector<8x128xf32>
    %98 = arith.divf %91, %97 : vector<8x128xf32>
    %99 = vector.broadcast %28 : vector<8x1xf32> to vector<8x128xf32>
    %100 = vector.broadcast %47 : vector<1x128xf32> to vector<8x128xf32>
    %101 = arith.maximumf %99, %100 : vector<8x128xf32>
    %102 = vector.broadcast %22 : vector<8x1xf32> to vector<8x128xf32>
    %103 = vector.broadcast %41 : vector<1x128xf32> to vector<8x128xf32>
    %104 = arith.minimumf %102, %103 : vector<8x128xf32>
    %105 = arith.subf %101, %104 : vector<8x128xf32>
    %cst_21 = arith.constant 0.000000e+00 : f32
    %106 = vector.broadcast %cst_21 : f32 to vector<8x128xf32>
    %107 = arith.maximumf %105, %106 : vector<8x128xf32>
    %108 = vector.broadcast %31 : vector<8x1xf32> to vector<8x128xf32>
    %109 = vector.broadcast %50 : vector<1x128xf32> to vector<8x128xf32>
    %110 = arith.maximumf %108, %109 : vector<8x128xf32>
    %111 = vector.broadcast %25 : vector<8x1xf32> to vector<8x128xf32>
    %112 = vector.broadcast %44 : vector<1x128xf32> to vector<8x128xf32>
    %113 = arith.minimumf %111, %112 : vector<8x128xf32>
    %114 = arith.subf %110, %113 : vector<8x128xf32>
    %cst_22 = arith.constant 0.000000e+00 : f32
    %115 = vector.broadcast %cst_22 : f32 to vector<8x128xf32>
    %116 = arith.maximumf %114, %115 : vector<8x128xf32>
    %117 = arith.mulf %107, %116 : vector<8x128xf32>
    %118 = arith.subf %117, %95 : vector<8x128xf32>
    %cst_23 = arith.constant 9.99999971E-10 : f32
    %119 = vector.broadcast %cst_23 : f32 to vector<8x128xf32>
    %120 = arith.addf %117, %119 : vector<8x128xf32>
    %121 = arith.divf %118, %120 : vector<8x128xf32>
    %122 = arith.subf %98, %121 : vector<8x128xf32>
    %cst_24 = arith.constant 5.000000e+00 : f32
    %123 = vector.broadcast %cst_24 : f32 to vector<8x128xf32>
    %124 = arith.mulf %123, %72 : vector<8x128xf32>
    %cst_25 = arith.constant 2.000000e+00 : f32
    %125 = vector.broadcast %cst_25 : f32 to vector<8x128xf32>
    %126 = arith.mulf %125, %15 : vector<8x128xf32>
    %127 = arith.addf %124, %126 : vector<8x128xf32>
    %cst_26 = arith.constant 2.000000e+00 : f32
    %128 = vector.broadcast %cst_26 : f32 to vector<8x128xf32>
    %129 = arith.mulf %128, %122 : vector<8x128xf32>
    %130 = arith.subf %127, %129 : vector<8x128xf32>
    %c0_27 = arith.constant 0 : index
    %c0_28 = arith.constant 0 : index
    %131 = vector.load %arg6[%c0_27, %c0_28] : memref<8x128xf32, #tpu.memory_space<vmem>>, vector<8x128xf32>
    tpu.vector_store %arg6[%c0_27, %c0_28], %130 {strides = array<i32>} : memref<8x128xf32, #tpu.memory_space<vmem>>, vector<8x128xf32>,
    return
  }
  func.func @transform_0(%arg0: i32, %arg1: i32) -> (i32, i32) {
    %c0_i32 = arith.constant 0 : i32
    %c0_i32_0 = arith.constant 0 : i32
    return %arg0, %c0_i32 : i32, i32
  }
  func.func @transform_1(%arg0: i32, %arg1: i32) -> (i32, i32) {
    %c0_i32 = arith.constant 0 : i32
    %c0_i32_0 = arith.constant 0 : i32
    return %arg0, %c0_i32 : i32, i32
  }
  func.func @transform_2(%arg0: i32, %arg1: i32) -> (i32, i32) {
    %c0_i32 = arith.constant 0 : i32
    %c0_i32_0 = arith.constant 0 : i32
    return %c0_i32, %arg1 : i32, i32
  }
  func.func @transform_3(%arg0: i32, %arg1: i32) -> (i32, i32) {
    %c0_i32 = arith.constant 0 : i32
    %c0_i32_0 = arith.constant 0 : i32
    return %c0_i32, %arg1 : i32, i32
  }
  func.func @transform_4(%arg0: i32, %arg1: i32) -> (i32, i32) {
    %c0_i32 = arith.constant 0 : i32
    return %arg0, %arg1 : i32, i32
  }
}

</mosaic_0001>

<llo_original>
// kernel: compute_cost_matrix.1
$region0: #{compute_cost_matrix.1}
  #allocation0 [shape = 'u32[]', space=smem, size = 0x4, offset = 0x4, fixed_abs, tag = 'smem constant byte address 0x4 - core index']
  #allocation1 [shape = 'u32[144,128]{1,0:T(1,128)}', space=vmem, size = 0x12000, scoped, tag = 'internal scratch']
  %s0 = inlined_call_operand.vmem [shape: f32[16,128], index: 0, kind: input, shape index: {}]
  %s1 = inlined_call_operand.vmem [shape: f32[16,4], index: 1, kind: input, shape index: {}]
  %s2 = inlined_call_operand.vmem [shape: f32[128,128], index: 2, kind: input, shape index: {}]
  %s3 = inlined_call_operand.vmem [shape: f32[4,128], index: 3, kind: input, shape index: {}]
  %s4 = inlined_call_operand.vmem [shape: f32[16,128], index: 4, kind: output, shape index: {}]
  %s5 = sld [smem:[#allocation0]]
  $region49: #{compute_cost_matrix.1} parent=0
    _
  %s7 = ssub.s32 1, %s5
  %s8 = scalar_select 0, %s7, %s5
  loop: start=0, step=1, limit=4
  $region2: #{compute_cost_matrix.1} parent=0 // loop_pre_header
    _
  $region3: #{compute_cost_matrix.1} parent=0 // loop_header
    %s10 = sphi 0, %s14
    %p11 = scmp.ge.s32.totalorder %s10, 4
    %s17 = sphi 0, %s29
    %s18 = sphi 0, %s25
    %s19 = sphi 0, %s17
    %s20 = sphi 0, %s18
    %s21 = sphi 0, %s19
    %s22 = sphi 0, %s20
    %s32 = sphi 0, %s34
    %s35 = sphi 0, %s32
    %s36 = sphi 0, %s35
    %s52 = sphi 0, %s36
    %s58 = sphi 0, %s60
    %s61 = sphi 0, %s58
    %s62 = sphi 0, %s61
    %s78 = sphi 0, %s62
    %s84 = sphi 0, %s86
    %s87 = sphi 0, %s84
    %s88 = sphi 0, %s87
    %s104 = sphi 0, %s88
    %s110 = sphi 0, %s112
    %s113 = sphi 0, %s110
    %s114 = sphi 0, %s113
    %s130 = sphi 0, %s114
    %s138 = sphi 0, %s140
    %s141 = sphi 0, %s138
    %s142 = sphi 0, %s141
    %s158 = sphi 0, %s142
  $region4: #{compute_cost_matrix.1} parent=0 // loop_header_branch
    %13 = sbr.rel (%p11) target = $region8
  $region5: #{compute_cost_matrix.1} parent=0 // loop_body
    %s15 = ssub.s32 %s10, 1
    %s16 = ssub.s32 %s10, 2
    %s23 = sadd.s32 1, %s18
    %p24 = scmp.ge.s32.totalorder %s23, 1
    %s25 = scalar_select %p24, 0, %s23
    %s26 = sadd.s32 1, %s17
    %s27 = scalar_select %p24, %s26, %s17
    %p28 = scmp.ge.s32.totalorder %s27, 2
    %s29 = scalar_select %p28, 0, %s27
    %s30 = ssub.s32 %s17, %s29
    %p31 = scmp.eq.s32.totalorder %s30, 0
    %s33 = sadd.s32 %s32, 1
    %s34 = scalar_select %p31, %s32, %s33
    %p37 = pneg %p31
    %p38 = scmp.eq.s32.totalorder %s10, 1
    %p39 = por %p37, %p38
    %p40 = scmp.ne.s32.totalorder %s32, %s35
    %p41 = scmp.eq.s32.totalorder %s10, 0
    %p42 = por %p40, %p41
    %p43 = scmp.ne.s32.totalorder %s32, %s35
    %p44 = scmp.eq.s32.totalorder %s15, 1
    %p45 = por %p43, %p44
    %p46 = scmp.ne.s32.totalorder %s35, %s36
    %p47 = scmp.eq.s32.totalorder %s15, 0
    %p48 = por %p46, %p47
    %p49 = scmp.ne.s32.totalorder %s35, %s36
    %p50 = scmp.eq.s32.totalorder %s16, 1
    %p51 = por %p49, %p50
    %p53 = scmp.ne.s32.totalorder %s36, %s52
    %p54 = scmp.eq.s32.totalorder %s16, 0
    %p55 = por %p53, %p54
    %s56 = ssub.s32 %s17, %s29
    %p57 = scmp.eq.s32.totalorder %s56, 0
    %s59 = sadd.s32 %s58, 1
    %s60 = scalar_select %p57, %s58, %s59
    %p63 = pneg %p57
    %p64 = scmp.eq.s32.totalorder %s10, 1
    %p65 = por %p63, %p64
    %p66 = scmp.ne.s32.totalorder %s58, %s61
    %p67 = scmp.eq.s32.totalorder %s10, 0
    %p68 = por %p66, %p67
    %p69 = scmp.ne.s32.totalorder %s58, %s61
    %p70 = scmp.eq.s32.totalorder %s15, 1
    %p71 = por %p69, %p70
    %p72 = scmp.ne.s32.totalorder %s61, %s62
    %p73 = scmp.eq.s32.totalorder %s15, 0
    %p74 = por %p72, %p73
    %p75 = scmp.ne.s32.totalorder %s61, %s62
    %p76 = scmp.eq.s32.totalorder %s16, 1
    %p77 = por %p75, %p76
    %p79 = scmp.ne.s32.totalorder %s62, %s78
    %p80 = scmp.eq.s32.totalorder %s16, 0
    %p81 = por %p79, %p80
    %s82 = ssub.s32 %s18, %s25
    %p83 = scmp.eq.s32.totalorder %s82, 0
    %s85 = sadd.s32 %s84, 1
    %s86 = scalar_select %p83, %s84, %s85
    %p89 = pneg %p83
    %p90 = scmp.eq.s32.totalorder %s10, 1
    %p91 = por %p89, %p90
    %p92 = scmp.ne.s32.totalorder %s84, %s87
    %p93 = scmp.eq.s32.totalorder %s10, 0
    %p94 = por %p92, %p93
    %p95 = scmp.ne.s32.totalorder %s84, %s87
    %p96 = scmp.eq.s32.totalorder %s15, 1
    %p97 = por %p95, %p96
    %p98 = scmp.ne.s32.totalorder %s87, %s88
    %p99 = scmp.eq.s32.totalorder %s15, 0
    %p100 = por %p98, %p99
    %p101 = scmp.ne.s32.totalorder %s87, %s88
    %p102 = scmp.eq.s32.totalorder %s16, 1
    %p103 = por %p101, %p102
    %p105 = scmp.ne.s32.totalorder %s88, %s104
    %p106 = scmp.eq.s32.totalorder %s16, 0
    %p107 = por %p105, %p106
    %s108 = ssub.s32 %s18, %s25
    %p109 = scmp.eq.s32.totalorder %s108, 0
    %s111 = sadd.s32 %s110, 1
    %s112 = scalar_select %p109, %s110, %s111
    %p115 = pneg %p109
    %p116 = scmp.eq.s32.totalorder %s10, 1
    %p117 = por %p115, %p116
    %p118 = scmp.ne.s32.totalorder %s110, %s113
    %p119 = scmp.eq.s32.totalorder %s10, 0
    %p120 = por %p118, %p119
    %p121 = scmp.ne.s32.totalorder %s110, %s113
    %p122 = scmp.eq.s32.totalorder %s15, 1
    %p123 = por %p121, %p122
    %p124 = scmp.ne.s32.totalorder %s113, %s114
    %p125 = scmp.eq.s32.totalorder %s15, 0
    %p126 = por %p124, %p125
    %p127 = scmp.ne.s32.totalorder %s113, %s114
    %p128 = scmp.eq.s32.totalorder %s16, 1
    %p129 = por %p127, %p128
    %p131 = scmp.ne.s32.totalorder %s114, %s130
    %p132 = scmp.eq.s32.totalorder %s16, 0
    %p133 = por %p131, %p132
    %s134 = ssub.s32 %s17, %s29
    %s135 = ssub.s32 %s18, %s25
    %s136 = sor.u32 %s134, %s135
    %p137 = scmp.eq.s32.totalorder %s136, 0
    %s139 = sadd.s32 %s138, 1
    %s140 = scalar_select %p137, %s138, %s139
    %p143 = pneg %p137
    %p144 = scmp.eq.s32.totalorder %s10, 1
    %p145 = por %p143, %p144
    %p146 = scmp.ne.s32.totalorder %s138, %s141
    %p147 = scmp.eq.s32.totalorder %s10, 0
    %p148 = por %p146, %p147
    %p149 = scmp.ne.s32.totalorder %s138, %s141
    %p150 = scmp.eq.s32.totalorder %s15, 1
    %p151 = por %p149, %p150
    %p152 = scmp.ne.s32.totalorder %s141, %s142
    %p153 = scmp.eq.s32.totalorder %s15, 0
    %p154 = por %p152, %p153
    %p155 = scmp.ne.s32.totalorder %s141, %s142
    %p156 = scmp.eq.s32.totalorder %s16, 1
    %p157 = por %p155, %p156
    %p159 = scmp.ne.s32.totalorder %s142, %s158
    %p160 = scmp.eq.s32.totalorder %s16, 0
    %p161 = por %p159, %p160
    %p162 = scmp.le.s32.totalorder 1, %s10
    %p163 = scmp.lt.s32.totalorder %s10, 3
    %p164 = pnand %p162, %p163
    %p165 = pneg %p164
    // Predicated region
    $region9: #{compute_cost_matrix.1} parent=5 // pred_check
      _
    $region10: #{compute_cost_matrix.1} parent=5 // pred_check_branch
      %167 = sbr.rel (%p164) target = $region12
    $region11: #{compute_cost_matrix.1} parent=5 // pred_region
      %s168 = ssub.s32 %s10, 1
      // Predicated region
      $region13: #{compute_cost_matrix.1} parent=11 // pred_check
        %p169 = pneg %p100
      $region14: #{compute_cost_matrix.1} parent=11 // pred_check_branch
        %171 = sbr.rel (%p169) target = $region16
      $region15: #{compute_cost_matrix.1} parent=11 // pred_region
        %p172 = scmp.lt.s32.totalorder %s20, 0
        %s173 = scalar_select %p172, %s20, 0
        %s174 = smul.addr %s173, 8
        %s175 = scalar_lea.vmem %s2, %s174
      $region16: #{compute_cost_matrix.1} parent=11 // pred_fallthru
        _
      // Predicated region
      $region17: #{compute_cost_matrix.1} parent=11 // pred_check
        %p176 = pneg %p126
      $region18: #{compute_cost_matrix.1} parent=11 // pred_check_branch
        %178 = sbr.rel (%p176) target = $region20
      $region19: #{compute_cost_matrix.1} parent=11 // pred_region
        %p179 = scmp.lt.s32.totalorder %s20, 0
        %s180 = scalar_select %p179, %s20, 0
        %s181 = smul.addr %s180, 4
        %s182 = scalar_lea.vmem %s3, %s181
      $region20: #{compute_cost_matrix.1} parent=11 // pred_fallthru
        _
    $region12: #{compute_cost_matrix.1} parent=5 // pred_fallthru
      _
    %p183 = scmp.lt.s32.totalorder %s10, 2
    // Predicated region
    $region21: #{compute_cost_matrix.1} parent=5 // pred_check
      %p184 = pneg %p183
    $region22: #{compute_cost_matrix.1} parent=5 // pred_check_branch
      %186 = sbr.rel (%p184) target = $region24
    $region23: #{compute_cost_matrix.1} parent=5 // pred_region
      // Predicated region
      $region25: #{compute_cost_matrix.1} parent=23 // pred_check
        %p187 = pneg %p42
      $region26: #{compute_cost_matrix.1} parent=23 // pred_check_branch
        %189 = sbr.rel (%p187) target = $region28
      $region27: #{compute_cost_matrix.1} parent=23 // pred_region
        %p190 = scmp.lt.s32.totalorder %s17, 1
        %s191 = scalar_select %p190, %s17, 1
        %s192 = smul.addr %s191, 8
        %s193 = scalar_lea.vmem %s0, %s192
      $region28: #{compute_cost_matrix.1} parent=23 // pred_fallthru
        _
      // Predicated region
      $region29: #{compute_cost_matrix.1} parent=23 // pred_check
        %p194 = pneg %p68
      $region30: #{compute_cost_matrix.1} parent=23 // pred_check_branch
        %196 = sbr.rel (%p194) target = $region32
      $region31: #{compute_cost_matrix.1} parent=23 // pred_region
        %p197 = scmp.lt.s32.totalorder %s17, 1
        %s198 = scalar_select %p197, %s17, 1
        %s199 = smul.addr %s198, 8
        %s200 = scalar_lea.vmem %s1, %s199
      $region32: #{compute_cost_matrix.1} parent=23 // pred_fallthru
        _
    $region24: #{compute_cost_matrix.1} parent=5 // pred_fallthru
      _
    %p201 = scmp.le.s32.totalorder 1, %s10
    %p202 = scmp.lt.s32.totalorder %s10, 3
    %p203 = pnand %p201, %p202
    %p204 = pneg %p203
    // Predicated region
    $region33: #{compute_cost_matrix.1} parent=5 // pred_check
      _
    $region34: #{compute_cost_matrix.1} parent=5 // pred_check_branch
      %206 = sbr.rel (%p203) target = $region36
    $region35: #{compute_cost_matrix.1} parent=5 // pred_region
      %s207 = ssub.s32 %s10, 1
      %p208 = scmp.lt.s32.totalorder %s19, 1
      %s209 = scalar_select %p208, %s19, 1
      %s210 = smul.addr %s209, 8
      %s211 = scalar_lea.vmem %s0, %s210
      %p212 = pneg %p48
      %p213 = pneg %p45
      %p214 = scmp.lt.s32.totalorder %s19, 1
      %s215 = scalar_select %p214, %s19, 1
      %s216 = smul.addr %s215, 8
      %s217 = scalar_lea.vmem %s1, %s216
      %p218 = pneg %p74
      %p219 = pneg %p71
      %p220 = scmp.lt.s32.totalorder %s20, 0
      %s221 = scalar_select %p220, %s20, 0
      %s222 = smul.addr %s221, 8
      %s223 = scalar_lea.vmem %s2, %s222
      %p224 = pneg %p100
      %p225 = pneg %p97
      %p226 = scmp.lt.s32.totalorder %s20, 0
      %s227 = scalar_select %p226, %s20, 0
      %s228 = smul.addr %s227, 4
      %s229 = scalar_lea.vmem %s3, %s228
      %p230 = pneg %p126
      %p231 = pneg %p123
      %p232 = pneg %p154
      %p233 = pneg %p151
      %p234 = scmp.lt.s32.totalorder %s19, 1
      %s235 = scalar_select %p234, %s19, 1
      %p236 = scmp.lt.s32.totalorder %s20, 0
      %s237 = scalar_select %p236, %s20, 0
      %s238 = sadd.s32 %s237, %s235
      %s239 = smul.addr %s238, 8
      %s240 = scalar_lea.vmem %s4, %s239
      %p241 = scmp.lt.s32.totalorder %s19, 1
      %s242 = scalar_select %p241, %s19, 1
      %s243 = smul.addr %s242, 8
      %s244 = scalar_lea.vmem %s0, %s243
      %p245 = scmp.lt.s32.totalorder %s19, 1
      %s246 = scalar_select %p245, %s19, 1
      %s247 = smul.addr %s246, 8
      %s248 = scalar_lea.vmem %s1, %s247
      %p249 = scmp.lt.s32.totalorder %s20, 0
      %s250 = scalar_select %p249, %s20, 0
      %s251 = smul.addr %s250, 8
      %s252 = scalar_lea.vmem %s2, %s251
      %p253 = scmp.lt.s32.totalorder %s20, 0
      %s254 = scalar_select %p253, %s20, 0
      %s255 = smul.addr %s254, 4
      %s256 = scalar_lea.vmem %s3, %s255
      %p257 = scmp.lt.s32.totalorder %s19, 1
      %s258 = scalar_select %p257, %s19, 1
      %p259 = scmp.lt.s32.totalorder %s20, 0
      %s260 = scalar_select %p259, %s20, 0
      %s261 = sadd.s32 %s260, %s258
      %s262 = smul.addr %s261, 8
      %s263 = scalar_lea.vmem %s4, %s262
      %v264 = vld [vmem:[%s244] sm:$0xff]
      %v265 = vld [vmem:[%s248] sm:$0xff]
      %v266 = vld [vmem:[%s252] sm:$0xff]
      %v267 = vld [vmem:[%s252 + $0x8] sm:$0xff]
      %v268 = vld [vmem:[%s252 + $0x10] sm:$0xff]
      %v269 = vld [vmem:[%s252 + $0x18] sm:$0xff]
      %v270 = vld [vmem:[%s252 + $0x20] sm:$0xff]
      %v271 = vld [vmem:[%s252 + $0x28] sm:$0xff]
      %v272 = vld [vmem:[%s252 + $0x30] sm:$0xff]
      %v273 = vld [vmem:[%s252 + $0x38] sm:$0xff]
      %v274 = vld [vmem:[%s252 + $0x40] sm:$0xff]
      %v275 = vld [vmem:[%s252 + $0x48] sm:$0xff]
      %v276 = vld [vmem:[%s252 + $0x50] sm:$0xff]
      %v277 = vld [vmem:[%s252 + $0x58] sm:$0xff]
      %v278 = vld [vmem:[%s252 + $0x60] sm:$0xff]
      %v279 = vld [vmem:[%s252 + $0x68] sm:$0xff]
      %v280 = vld [vmem:[%s252 + $0x70] sm:$0xff]
      %v281 = vld [vmem:[%s252 + $0x78] sm:$0xff]
      %v282 = vld [vmem:[%s256] sm:$0xf]
      %283 = vmax.xlane.f32.xlu0 %v264
      %v284 = vpop.xlane.xlu0 %283
      %v285 = vsub.f32 %v264, %v284
      %v286 = vmul.f32 %v285, 1.442695
      %v287 = vpow.pop %v286
      %288 = vadd.xlane.f32.xlu0 %v287
      %v289 = vpop.xlane.xlu0 %288
      %v290 = vrcp.pop %v289
      %v291 = vmul.f32 %v287, %v290
      %292 = vmatprep.subr.mxu0 0.0
      %293 = vmatpush1.msra.mxu0 %v281
      %294 = vmatprep.subr.mxu0 0.0
      %295 = vmatpush1.msra.mxu0 %v280
      %296 = vmatprep.subr.mxu0 0.0
      %297 = vmatpush1.msra.mxu0 %v279
      %298 = vmatprep.subr.mxu0 0.0
      %299 = vmatpush1.msra.mxu0 %v278
      %300 = vmatprep.subr.mxu0 0.0
      %301 = vmatpush1.msra.mxu0 %v277
      %302 = vmatprep.subr.mxu0 0.0
      %303 = vmatpush1.msra.mxu0 %v276
      %304 = vmatprep.subr.mxu0 0.0
      %305 = vmatpush1.msra.mxu0 %v275
      %306 = vmatprep.subr.mxu0 0.0
      %307 = vmatpush1.msra.mxu0 %v274
      %308 = vmatprep.subr.mxu0 0.0
      %309 = vmatpush1.msra.mxu0 %v273
      %310 = vmatprep.subr.mxu0 0.0
      %311 = vmatpush1.msra.mxu0 %v272
      %312 = vmatprep.subr.mxu0 0.0
      %313 = vmatpush1.msra.mxu0 %v271
      %314 = vmatprep.subr.mxu0 0.0
      %315 = vmatpush1.msra.mxu0 %v270
      %316 = vmatprep.subr.mxu0 0.0
      %317 = vmatpush1.msra.mxu0 %v269
      %318 = vmatprep.subr.mxu0 0.0
      %319 = vmatpush1.msra.mxu0 %v268
      %320 = vmatprep.subr.mxu0 0.0
      %321 = vmatpush1.msra.mxu0 %v267
      %322 = vmatprep.subr.mxu0 0.0
      %323 = vmatpush1.msra.mxu0 %v266
      %324 = vmatprep.subr.mxu0 0.0
      %325 = vmatpush2.msra.mxu0 0.0
      %326 = vmatprep.subr.mxu0 0.0
      %327 = vmatpush2.msra.mxu0 0.0
      %328 = vmatprep.subr.mxu0 0.0
      %329 = vmatpush2.msra.mxu0 0.0
      %330 = vmatprep.subr.mxu0 0.0
      %331 = vmatpush2.msra.mxu0 0.0
      %332 = vmatprep.subr.mxu0 0.0
      %333 = vmatpush2.msra.mxu0 0.0
      %334 = vmatprep.subr.mxu0 0.0
      %335 = vmatpush2.msra.mxu0 0.0
      %336 = vmatprep.subr.mxu0 0.0
      %337 = vmatpush2.msra.mxu0 0.0
      %338 = vmatprep.subr.mxu0 0.0
      %339 = vmatpush2.msra.mxu0 0.0
      %340 = vmatprep.subr.mxu0 0.0
      %341 = vmatpush2.msra.mxu0 0.0
      %342 = vmatprep.subr.mxu0 0.0
      %343 = vmatpush2.msra.mxu0 0.0
      %344 = vmatprep.subr.mxu0 0.0
      %345 = vmatpush2.msra.mxu0 0.0
      %346 = vmatprep.subr.mxu0 0.0
      %347 = vmatpush2.msra.mxu0 0.0
      %348 = vmatprep.subr.mxu0 0.0
      %349 = vmatpush2.msra.mxu0 0.0
      %350 = vmatprep.subr.mxu0 0.0
      %351 = vmatpush2.msra.mxu0 0.0
      %352 = vmatprep.subr.mxu0 0.0
      %353 = vmatpush2.msra.mxu0 0.0
      %354 = vmatprep.subr.mxu0 0.0
      %355 = vmatpush2.msra.mxu0 0.0
      %356 = vmatprep.mubr.f32.mxu0 0.0
      %357 = vmatmul.mubr.f32.gmra.mxu0 %v291
      %v358 = vpop.f32.mrf.mxu0
      %v359 = vadd.f32 0.0, %v358
      %v360 = vpop.f32.mrf.mxu0
      %361 = vdwg.mxu0
      %v362 = vsub.f32 0.0, %v359
      %v363 = vmul.f32 %v265, 0.5
      %365 = vrot.lane.b32.xlu0 %v363, 126
      %v366 = vpop.permute.xlu0 %365
      %v368 = vsub.f32 %v265, %v366
      %v369 = vadd.f32 %v265, %v366
      %v370 = vsub.f32 %v369, %v368
      %372 = vrot.lane.b32.xlu0 %v370, 127
      %v373 = vpop.permute.xlu0 %372
      %v375 = vmul.f32 %v370, %v373
      %v376 = vmul.f32 %v282, 0.5
      %v378 = vrot.slane %v376, 2
      %v380 = vsub.f32 %v282, %v378
      %v381 = vadd.f32 %v282, %v378
      %v382 = vsub.f32 %v381, %v380
      %v384 = vrot.slane %v382, 1
      %v386 = vmul.f32 %v382, %v384
      %388 = vset.pattern.permute.xlu0 0
      %389 = vperm.xlu0 %388, %v265
      %v390 = vpop.permute.xlu0 %389
      %v392 = vlaneseq
      %v393 = vshrl.u32 %v392, 7
      %v394 = vsub.s32 0, %v393
      %v395 = vrot.slane %v282, %v394
      %v396 = vsub.f32 %v390, %v395
      %v397 = vand.u32 2147483647, %v396
      %398 = vset.pattern.permute.xlu0 1
      %399 = vperm.xlu0 %398, %v265
      %v400 = vpop.permute.xlu0 %399
      %v402 = vlaneseq
      %v403 = vshrl.u32 %v402, 7
      %v404 = vsub.s32 1, %v403
      %v405 = vrot.slane %v282, %v404
      %v406 = vsub.f32 %v400, %v405
      %v407 = vand.u32 2147483647, %v406
      %v408 = vadd.f32 %v397, %v407
      %409 = vset.pattern.permute.xlu0 2
      %410 = vperm.xlu0 %409, %v265
      %v411 = vpop.permute.xlu0 %410
      %v413 = vlaneseq
      %v414 = vshrl.u32 %v413, 7
      %v415 = vsub.s32 2, %v414
      %v416 = vrot.slane %v282, %v415
      %v417 = vsub.f32 %v411, %v416
      %v418 = vand.u32 2147483647, %v417
      %v419 = vadd.f32 %v408, %v418
      %420 = vset.pattern.permute.xlu0 3
      %421 = vperm.xlu0 %420, %v265
      %v422 = vpop.permute.xlu0 %421
      %v424 = vlaneseq
      %v425 = vshrl.u32 %v424, 7
      %v426 = vsub.s32 3, %v425
      %v427 = vrot.slane %v282, %v426
      %v428 = vsub.f32 %v422, %v427
      %v429 = vand.u32 2147483647, %v428
      %v430 = vadd.f32 %v419, %v429
      %432 = vset.pattern.permute.xlu0 0
      %433 = vperm.xlu0 %432, %v369
      %v434 = vpop.permute.xlu0 %433
      %v436 = vlaneseq
      %v437 = vshrl.u32 %v436, 7
      %v438 = vsub.s32 0, %v437
      %v439 = vrot.slane %v381, %v438
      %v440 = vmin.f32 %v434, %v439
      %442 = vset.pattern.permute.xlu0 0
      %443 = vperm.xlu0 %442, %v368
      %v444 = vpop.permute.xlu0 %443
      %v446 = vlaneseq
      %v447 = vshrl.u32 %v446, 7
      %v448 = vsub.s32 0, %v447
      %v449 = vrot.slane %v380, %v448
      %v450 = vmax.f32 %v444, %v449
      %v451 = vsub.f32 %v440, %v450
      %v452 = vmax.f32 %v451, 0.0
      %453 = vset.pattern.permute.xlu0 1
      %454 = vperm.xlu0 %453, %v369
      %v455 = vpop.permute.xlu0 %454
      %v457 = vlaneseq
      %v458 = vshrl.u32 %v457, 7
      %v459 = vsub.s32 1, %v458
      %v460 = vrot.slane %v381, %v459
      %v461 = vmin.f32 %v455, %v460
      %462 = vset.pattern.permute.xlu0 1
      %463 = vperm.xlu0 %462, %v368
      %v464 = vpop.permute.xlu0 %463
      %v466 = vlaneseq
      %v467 = vshrl.u32 %v466, 7
      %v468 = vsub.s32 1, %v467
      %v469 = vrot.slane %v380, %v468
      %v470 = vmax.f32 %v464, %v469
      %v471 = vsub.f32 %v461, %v470
      %v472 = vmax.f32 %v471, 0.0
      %v473 = vmul.f32 %v452, %v472
      %475 = vset.pattern.permute.xlu0 0
      %476 = vperm.xlu0 %475, %v375
      %v477 = vpop.permute.xlu0 %476
      %v479 = vlaneseq
      %v480 = vshrl.u32 %v479, 7
      %v481 = vsub.s32 0, %v480
      %v482 = vrot.slane %v386, %v481
      %v483 = vadd.f32 %v477, %v482
      %v484 = vsub.f32 %v483, %v473
      %v485 = vadd.f32 %v484, 1e-09
      %v486 = vrcp.pop %v485
      %v487 = vmul.f32 %v473, %v486
      %v488 = vmax.f32 %v434, %v439
      %v489 = vmin.f32 %v444, %v449
      %v490 = vsub.f32 %v488, %v489
      %v491 = vmax.f32 %v490, 0.0
      %v492 = vmax.f32 %v455, %v460
      %v493 = vmin.f32 %v464, %v469
      %v494 = vsub.f32 %v492, %v493
      %v495 = vmax.f32 %v494, 0.0
      %v496 = vmul.f32 %v491, %v495
      %v497 = vsub.f32 %v496, %v484
      %v498 = vadd.f32 %v496, 1e-09
      %v499 = vrcp.pop %v498
      %v500 = vmul.f32 %v497, %v499
      %v501 = vsub.f32 %v487, %v500
      %v502 = vmul.f32 %v430, 5.0
      %v503 = vmul.f32 %v362, 2.0
      %v504 = vadd.f32 %v502, %v503
      %v505 = vmul.f32 %v501, 2.0
      %v506 = vsub.f32 %v504, %v505
      %507 = vst [vmem:[%s263] sm:$0xff] %v506
      %p508 = scmp.lt.s32.totalorder %s19, 1
      %s509 = scalar_select %p508, %s19, 1
      %p510 = scmp.lt.s32.totalorder %s20, 0
      %s511 = scalar_select %p510, %s20, 0
      %s512 = sadd.s32 %s511, %s509
      %s513 = smul.addr %s512, 8
      %s514 = scalar_lea.vmem %s4, %s513
      // Predicated region
      $region37: #{compute_cost_matrix.1} parent=35 // pred_check
        %p515 = pneg %p151
      $region38: #{compute_cost_matrix.1} parent=35 // pred_check_branch
        %517 = sbr.rel (%p515) target = $region40
      $region39: #{compute_cost_matrix.1} parent=35 // pred_region
        _
      $region40: #{compute_cost_matrix.1} parent=35 // pred_fallthru
        _
    $region36: #{compute_cost_matrix.1} parent=5 // pred_fallthru
      _
    %p518 = scmp.le.s32.totalorder 2, %s10
    // Predicated region
    $region41: #{compute_cost_matrix.1} parent=5 // pred_check
      %p519 = pneg %p518
    $region42: #{compute_cost_matrix.1} parent=5 // pred_check_branch
      %521 = sbr.rel (%p519) target = $region44
    $region43: #{compute_cost_matrix.1} parent=5 // pred_region
      %s522 = ssub.s32 %s10, 2
      // Predicated region
      $region45: #{compute_cost_matrix.1} parent=43 // pred_check
        %p523 = pneg %p157
      $region46: #{compute_cost_matrix.1} parent=43 // pred_check_branch
        %525 = sbr.rel (%p523) target = $region48
      $region47: #{compute_cost_matrix.1} parent=43 // pred_region
        %p526 = scmp.lt.s32.totalorder %s21, 1
        %s527 = scalar_select %p526, %s21, 1
        %p528 = scmp.lt.s32.totalorder %s22, 0
        %s529 = scalar_select %p528, %s22, 0
        %s530 = sadd.s32 %s529, %s527
        %s531 = smul.addr %s530, 8
        %s532 = scalar_lea.vmem %s4, %s531
      $region48: #{compute_cost_matrix.1} parent=43 // pred_fallthru
        _
    $region44: #{compute_cost_matrix.1} parent=5 // pred_fallthru
      _
  $region6: #{compute_cost_matrix.1} parent=0 // loop_footer
    %s14 = sadd.s32 1, %s10
  $region7: #{compute_cost_matrix.1} parent=0 // loop_footer_branch
    %9 = sbr.rel target = $region3
  $region8: #{compute_cost_matrix.1} parent=0 // loop_exit
    _

</llo_original>
